<compile_context>
chip_gen: v5e
topology: v5e:2x2
jax: 0.10.0
libtpu: 0.0.40
codegen_flags: <defaults>
</compile_context>

<pallas_src>
import functools

import jax
import jax.numpy as jnp
from jax.experimental import pallas as pl
from jax.experimental.pallas import tpu as pltpu

_LANE = 128


def _round_up(a, m):
    return ((a + m - 1) // m) * m


# ----------------------------- Pallas kernel ------------------------------ #
def mlp_kernel(x_ref, *refs, matmul_dtype):
    """refs = (w1, b1, w2, b2, ..., wL, bL, o_ref).

    x_ref:   (tile, in_dim)  batch-major input block
    w_i:     (out, in)       PyTorch nn.Linear layout
    b_i:     (out, 1)        lane-broadcast bias
    o_ref:   (1, tile)       feature-major, lane-dense output block
    """
    o_ref = refs[-1]
    param_refs = refs[:-1]
    n_layers = len(param_refs) // 2

    cast = lambda a: a.astype(matmul_dtype)

    # Layer 1: contract dim 1 of W (out,in) with dim 1 of x (tile,in) — the MXU
    # consumes the transposed operand directly; result is (out, tile),
    # feature-major with batch on the lane axis for all following layers.
    w0 = param_refs[0][...]
    b0 = param_refs[1][...]
    h = jax.lax.dot_general(
        cast(w0), cast(x_ref[...]),
        dimension_numbers=(((1,), (1,)), ((), ())),
        preferred_element_type=jnp.float32) + b0          # f32 accumulate + f32 bias
    h = jnp.tanh(h)                                       # f32 tanh (EUP)

    for i in range(1, n_layers):                          # static unroll (10 layers)
        w = param_refs[2 * i][...]                        # (out, in)
        b = param_refs[2 * i + 1][...]                    # (out, 1)
        h = jnp.dot(cast(w), cast(h),
                    preferred_element_type=jnp.float32) + b
        if i < n_layers - 1:                              # final Linear has no Tanh
            h = jnp.tanh(h)

    o_ref[...] = h.astype(o_ref.dtype)


# ------------------------------- Wrapper ----------------------------------- #
def mlp_forward(x, params, *, tile_m=4096, matmul_dtype=jnp.bfloat16):
    """x: (N, in_dim) f32; params: list of (W(out,in), b(out,1)). Returns (N, 1).

    tile_m: max batch-tile size (lane multiple). 4096 is safe on every generation
    (incl. v7x's 64 MiB VMEM); v5e/v6e tolerate 8192-16384 if desired.
    matmul_dtype: dtype of the MXU inputs (accumulation is always f32).
    """
    n, d = x.shape

    if n <= 2 * _LANE:
        # Tiny batch: a single block equal to the full array (always a legal
        # block shape); grid = 1 is unavoidable here.
        tile = n
    else:
        # Lane-multiple tile, capped so the grid has >= 2 steps (keeps both
        # TensorCores busy on v7x) and at tile_m (VMEM / pipelining sweet spot).
        tile = min(_round_up(tile_m, _LANE), _round_up(pl.cdiv(n, 2), _LANE))
    grid = pl.cdiv(n, tile)

    in_specs = [pl.BlockSpec((tile, d), lambda i: (i, 0))]
    flat_params = []
    for w, b in params:
        # Constant index_map: weights/biases stay resident in VMEM across all
        # grid steps (the pipeline skips the re-DMA).
        in_specs.append(pl.BlockSpec(w.shape, lambda i: (0, 0)))
        in_specs.append(pl.BlockSpec(b.shape, lambda i: (0, 0)))
        flat_params.extend([w, b])

    out_dim = params[-1][0].shape[0]                      # = 1
    kernel = functools.partial(mlp_kernel, matmul_dtype=matmul_dtype)
    out = pl.pallas_call(
        kernel,
        out_shape=jax.ShapeDtypeStruct((out_dim, n), jnp.float32),
        grid=(grid,),
        in_specs=in_specs,
        out_specs=pl.BlockSpec((out_dim, tile), lambda i: (0, i)),
        compiler_params=pltpu.CompilerParams(
            dimension_semantics=("parallel",)),           # shard batch tiles across TCs
    )(x, *flat_params)
    return out.T                                          # (N, 1)


# --------------------------- Parameter creation ---------------------------- #
def init_mlp_params(key, in_dim):
    """Deterministic init matching PyTorch nn.Linear default
    (uniform(-1/sqrt(fan_in), 1/sqrt(fan_in)) for weight and bias).
    Weights kept in PyTorch (out_features, in_features) layout; bias (out, 1)."""
    dims = [in_dim, 64, 64, 64, 64, 64, 64, 32, 32, 32, 1]
    params = []
    for fan_in, fan_out in zip(dims[:-1], dims[1:]):
        key, kw, kb = jax.random.split(key, 3)
        bound = 1.0 / jnp.sqrt(jnp.float32(fan_in))
        w = jax.random.uniform(kw, (fan_out, fan_in), jnp.float32,
                               minval=-bound, maxval=bound)
        b = jax.random.uniform(kb, (fan_out, 1), jnp.float32,
                               minval=-bound, maxval=bound)
        params.append((w, b))
    return params


# ------------------------------ Reference ---------------------------------- #
def mlp_reference(x, params):
    h = x                                                 # (N, in_dim), pure f32
    for i, (w, b) in enumerate(params):
        h = h @ w.T + b.T
        if i < len(params) - 1:
            h = jnp.tanh(h)
    return h                                              # (N, 1)


# --------------------------------- Main ------------------------------------ #
if __name__ == "__main__":
    key = jax.random.PRNGKey(0)
    in_dim = 2                        # PINN inputs, e.g. (x, t)

    kx1, kx2, kp = jax.random.split(key, 3)
    params = init_mlp_params(kp, in_dim)

    # Small batch (single whole-array block, grid = 1) and a batch that
    # exercises grid >= 2 with a ragged last tile.
    x_small = jax.random.normal(kx1, (8, in_dim), jnp.float32)
    x_big = jax.random.normal(kx2, (384, in_dim), jnp.float32)

    fwd_bf16 = jax.jit(functools.partial(mlp_forward, matmul_dtype=jnp.bfloat16))
    fwd_f32 = jax.jit(functools.partial(mlp_forward, matmul_dtype=jnp.float32))

    for x in (x_small, x_big):
        y_ref = mlp_reference(x, params)

        # Strict-precision path (f32 MXU inputs): matches reference tightly.
        y32 = fwd_f32(x, params)
        jax.block_until_ready(y32)
        assert y32.shape == (x.shape[0], 1), y32.shape
        assert jnp.allclose(y32, y_ref, atol=1e-5, rtol=1e-5), (
            float(jnp.max(jnp.abs(y32 - y_ref))))

        # Fast path (bf16 MXU inputs, f32 accumulation): looser tolerance.
        ybf = fwd_bf16(x, params)
        jax.block_until_ready(ybf)
        assert ybf.shape == (x.shape[0], 1), ybf.shape
        assert jnp.allclose(ybf, y_ref, atol=5e-2, rtol=5e-2), (
            float(jnp.max(jnp.abs(ybf - y_ref))))

    print("KERNEL_OK")
</pallas_src>

<mosaic_0001>
module attributes {stable_mosaic.version = 11 : i64} {
  func.func @mlp_kernel(%arg0: i32, %arg1: memref<8x2xf32, #tpu.memory_space<vmem>>, %arg2: memref<64x2xf32, #tpu.memory_space<vmem>>, %arg3: memref<64x1xf32, #tpu.memory_space<vmem>>, %arg4: memref<64x64xf32, #tpu.memory_space<vmem>>, %arg5: memref<64x1xf32, #tpu.memory_space<vmem>>, %arg6: memref<64x64xf32, #tpu.memory_space<vmem>>, %arg7: memref<64x1xf32, #tpu.memory_space<vmem>>, %arg8: memref<64x64xf32, #tpu.memory_space<vmem>>, %arg9: memref<64x1xf32, #tpu.memory_space<vmem>>, %arg10: memref<64x64xf32, #tpu.memory_space<vmem>>, %arg11: memref<64x1xf32, #tpu.memory_space<vmem>>, %arg12: memref<64x64xf32, #tpu.memory_space<vmem>>, %arg13: memref<64x1xf32, #tpu.memory_space<vmem>>, %arg14: memref<32x64xf32, #tpu.memory_space<vmem>>, %arg15: memref<32x1xf32, #tpu.memory_space<vmem>>, %arg16: memref<32x32xf32, #tpu.memory_space<vmem>>, %arg17: memref<32x1xf32, #tpu.memory_space<vmem>>, %arg18: memref<32x32xf32, #tpu.memory_space<vmem>>, %arg19: memref<32x1xf32, #tpu.memory_space<vmem>>, %arg20: memref<1x32xf32, #tpu.memory_space<vmem>>, %arg21: memref<1x1xf32, #tpu.memory_space<vmem>>, %arg22: memref<1x8xf32, #tpu.memory_space<vmem>>) attributes {dimension_semantics = [#tpu.dimension_semantics<parallel>], iteration_bounds = array<i64: 1>, scalar_prefetch = 0 : i64, scratch_operands = 0 : i64, tpu.core_type = #tpu.core_type<tc>, window_params = [{transform_indices = @transform_0, window_bounds = array<i64: 8, 2>}, {pipeline_mode = #tpu.pipeline_mode<synchronous>, transform_indices = @transform_1, window_bounds = array<i64: 64, 2>}, {pipeline_mode = #tpu.pipeline_mode<synchronous>, transform_indices = @transform_2, window_bounds = array<i64: 64, 1>}, {pipeline_mode = #tpu.pipeline_mode<synchronous>, transform_indices = @transform_3, window_bounds = array<i64: 64, 64>}, {pipeline_mode = #tpu.pipeline_mode<synchronous>, transform_indices = @transform_4, window_bounds = array<i64: 64, 1>}, {pipeline_mode = #tpu.pipeline_mode<synchronous>, transform_indices = @transform_5, window_bounds = array<i64: 64, 64>}, {pipeline_mode = #tpu.pipeline_mode<synchronous>, transform_indices = @transform_6, window_bounds = array<i64: 64, 1>}, {pipeline_mode = #tpu.pipeline_mode<synchronous>, transform_indices = @transform_7, window_bounds = array<i64: 64, 64>}, {pipeline_mode = #tpu.pipeline_mode<synchronous>, transform_indices = @transform_8, window_bounds = array<i64: 64, 1>}, {pipeline_mode = #tpu.pipeline_mode<synchronous>, transform_indices = @transform_9, window_bounds = array<i64: 64, 64>}, {pipeline_mode = #tpu.pipeline_mode<synchronous>, transform_indices = @transform_10, window_bounds = array<i64: 64, 1>}, {pipeline_mode = #tpu.pipeline_mode<synchronous>, transform_indices = @transform_11, window_bounds = array<i64: 64, 64>}, {pipeline_mode = #tpu.pipeline_mode<synchronous>, transform_indices = @transform_12, window_bounds = array<i64: 64, 1>}, {pipeline_mode = #tpu.pipeline_mode<synchronous>, transform_indices = @transform_13, window_bounds = array<i64: 32, 64>}, {pipeline_mode = #tpu.pipeline_mode<synchronous>, transform_indices = @transform_14, window_bounds = array<i64: 32, 1>}, {pipeline_mode = #tpu.pipeline_mode<synchronous>, transform_indices = @transform_15, window_bounds = array<i64: 32, 32>}, {pipeline_mode = #tpu.pipeline_mode<synchronous>, transform_indices = @transform_16, window_bounds = array<i64: 32, 1>}, {pipeline_mode = #tpu.pipeline_mode<synchronous>, transform_indices = @transform_17, window_bounds = array<i64: 32, 32>}, {pipeline_mode = #tpu.pipeline_mode<synchronous>, transform_indices = @transform_18, window_bounds = array<i64: 32, 1>}, {pipeline_mode = #tpu.pipeline_mode<synchronous>, transform_indices = @transform_19, window_bounds = array<i64: 1, 32>}, {pipeline_mode = #tpu.pipeline_mode<synchronous>, transform_indices = @transform_20, window_bounds = array<i64: 1, 1>}, {transform_indices = @transform_21, window_bounds = array<i64: 1, 8>}]} {
    %c0 = arith.constant 0 : index
    %c0_0 = arith.constant 0 : index
    %0 = vector.load %arg2[%c0, %c0_0] : memref<64x2xf32, #tpu.memory_space<vmem>>, vector<64x2xf32>
    %c0_1 = arith.constant 0 : index
    %c0_2 = arith.constant 0 : index
    %1 = vector.load %arg3[%c0_1, %c0_2] : memref<64x1xf32, #tpu.memory_space<vmem>>, vector<64x1xf32>
    %c0_3 = arith.constant 0 : index
    %c0_4 = arith.constant 0 : index
    %2 = vector.load %arg1[%c0_3, %c0_4] : memref<8x2xf32, #tpu.memory_space<vmem>>, vector<8x2xf32>
    %cst = arith.constant dense<0.000000e+00> : vector<64x8xf32>
    %3 = tpu.matmul %0, %2, %cst {dimension_numbers = #tpu.dot_dimension_numbers<[1], [1], [0], [0], [0, 0, 1, 0], [], []>} : vector<64x2xf32>, vector<8x2xf32>, vector<64x8xf32> -> vector<64x8xf32>
    %4 = vector.broadcast %1 : vector<64x1xf32> to vector<64x8xf32>
    %5 = arith.addf %3, %4 : vector<64x8xf32>
    %6 = math.tanh %5 : vector<64x8xf32>
    %c0_5 = arith.constant 0 : index
    %c0_6 = arith.constant 0 : index
    %7 = vector.load %arg4[%c0_5, %c0_6] : memref<64x64xf32, #tpu.memory_space<vmem>>, vector<64x64xf32>
    %c0_7 = arith.constant 0 : index
    %c0_8 = arith.constant 0 : index
    %8 = vector.load %arg5[%c0_7, %c0_8] : memref<64x1xf32, #tpu.memory_space<vmem>>, vector<64x1xf32>
    %cst_9 = arith.constant dense<0.000000e+00> : vector<64x8xf32>
    %9 = tpu.matmul %7, %6, %cst_9 {dimension_numbers = #tpu.dot_dimension_numbers<[1], [0], [0], [1], [0, 0, 1, 1], [], []>} : vector<64x64xf32>, vector<64x8xf32>, vector<64x8xf32> -> vector<64x8xf32>
    %10 = vector.broadcast %8 : vector<64x1xf32> to vector<64x8xf32>
    %11 = arith.addf %9, %10 : vector<64x8xf32>
    %12 = math.tanh %11 : vector<64x8xf32>
    %c0_10 = arith.constant 0 : index
    %c0_11 = arith.constant 0 : index
    %13 = vector.load %arg6[%c0_10, %c0_11] : memref<64x64xf32, #tpu.memory_space<vmem>>, vector<64x64xf32>
    %c0_12 = arith.constant 0 : index
    %c0_13 = arith.constant 0 : index
    %14 = vector.load %arg7[%c0_12, %c0_13] : memref<64x1xf32, #tpu.memory_space<vmem>>, vector<64x1xf32>
    %cst_14 = arith.constant dense<0.000000e+00> : vector<64x8xf32>
    %15 = tpu.matmul %13, %12, %cst_14 {dimension_numbers = #tpu.dot_dimension_numbers<[1], [0], [0], [1], [0, 0, 1, 1], [], []>} : vector<64x64xf32>, vector<64x8xf32>, vector<64x8xf32> -> vector<64x8xf32>
    %16 = vector.broadcast %14 : vector<64x1xf32> to vector<64x8xf32>
    %17 = arith.addf %15, %16 : vector<64x8xf32>
    %18 = math.tanh %17 : vector<64x8xf32>
    %c0_15 = arith.constant 0 : index
    %c0_16 = arith.constant 0 : index
    %19 = vector.load %arg8[%c0_15, %c0_16] : memref<64x64xf32, #tpu.memory_space<vmem>>, vector<64x64xf32>
    %c0_17 = arith.constant 0 : index
    %c0_18 = arith.constant 0 : index
    %20 = vector.load %arg9[%c0_17, %c0_18] : memref<64x1xf32, #tpu.memory_space<vmem>>, vector<64x1xf32>
    %cst_19 = arith.constant dense<0.000000e+00> : vector<64x8xf32>
    %21 = tpu.matmul %19, %18, %cst_19 {dimension_numbers = #tpu.dot_dimension_numbers<[1], [0], [0], [1], [0, 0, 1, 1], [], []>} : vector<64x64xf32>, vector<64x8xf32>, vector<64x8xf32> -> vector<64x8xf32>
    %22 = vector.broadcast %20 : vector<64x1xf32> to vector<64x8xf32>
    %23 = arith.addf %21, %22 : vector<64x8xf32>
    %24 = math.tanh %23 : vector<64x8xf32>
    %c0_20 = arith.constant 0 : index
    %c0_21 = arith.constant 0 : index
    %25 = vector.load %arg10[%c0_20, %c0_21] : memref<64x64xf32, #tpu.memory_space<vmem>>, vector<64x64xf32>
    %c0_22 = arith.constant 0 : index
    %c0_23 = arith.constant 0 : index
    %26 = vector.load %arg11[%c0_22, %c0_23] : memref<64x1xf32, #tpu.memory_space<vmem>>, vector<64x1xf32>
    %cst_24 = arith.constant dense<0.000000e+00> : vector<64x8xf32>
    %27 = tpu.matmul %25, %24, %cst_24 {dimension_numbers = #tpu.dot_dimension_numbers<[1], [0], [0], [1], [0, 0, 1, 1], [], []>} : vector<64x64xf32>, vector<64x8xf32>, vector<64x8xf32> -> vector<64x8xf32>
    %28 = vector.broadcast %26 : vector<64x1xf32> to vector<64x8xf32>
    %29 = arith.addf %27, %28 : vector<64x8xf32>
    %30 = math.tanh %29 : vector<64x8xf32>
    %c0_25 = arith.constant 0 : index
    %c0_26 = arith.constant 0 : index
    %31 = vector.load %arg12[%c0_25, %c0_26] : memref<64x64xf32, #tpu.memory_space<vmem>>, vector<64x64xf32>
    %c0_27 = arith.constant 0 : index
    %c0_28 = arith.constant 0 : index
    %32 = vector.load %arg13[%c0_27, %c0_28] : memref<64x1xf32, #tpu.memory_space<vmem>>, vector<64x1xf32>
    %cst_29 = arith.constant dense<0.000000e+00> : vector<64x8xf32>
    %33 = tpu.matmul %31, %30, %cst_29 {dimension_numbers = #tpu.dot_dimension_numbers<[1], [0], [0], [1], [0, 0, 1, 1], [], []>} : vector<64x64xf32>, vector<64x8xf32>, vector<64x8xf32> -> vector<64x8xf32>
    %34 = vector.broadcast %32 : vector<64x1xf32> to vector<64x8xf32>
    %35 = arith.addf %33, %34 : vector<64x8xf32>
    %36 = math.tanh %35 : vector<64x8xf32>
    %c0_30 = arith.constant 0 : index
    %c0_31 = arith.constant 0 : index
    %37 = vector.load %arg14[%c0_30, %c0_31] : memref<32x64xf32, #tpu.memory_space<vmem>>, vector<32x64xf32>
    %c0_32 = arith.constant 0 : index
    %c0_33 = arith.constant 0 : index
    %38 = vector.load %arg15[%c0_32, %c0_33] : memref<32x1xf32, #tpu.memory_space<vmem>>, vector<32x1xf32>
    %cst_34 = arith.constant dense<0.000000e+00> : vector<32x8xf32>
    %39 = tpu.matmul %37, %36, %cst_34 {dimension_numbers = #tpu.dot_dimension_numbers<[1], [0], [0], [1], [0, 0, 1, 1], [], []>} : vector<32x64xf32>, vector<64x8xf32>, vector<32x8xf32> -> vector<32x8xf32>
    %40 = vector.broadcast %38 : vector<32x1xf32> to vector<32x8xf32>
    %41 = arith.addf %39, %40 : vector<32x8xf32>
    %42 = math.tanh %41 : vector<32x8xf32>
    %c0_35 = arith.constant 0 : index
    %c0_36 = arith.constant 0 : index
    %43 = vector.load %arg16[%c0_35, %c0_36] : memref<32x32xf32, #tpu.memory_space<vmem>>, vector<32x32xf32>
    %c0_37 = arith.constant 0 : index
    %c0_38 = arith.constant 0 : index
    %44 = vector.load %arg17[%c0_37, %c0_38] : memref<32x1xf32, #tpu.memory_space<vmem>>, vector<32x1xf32>
    %cst_39 = arith.constant dense<0.000000e+00> : vector<32x8xf32>
    %45 = tpu.matmul %43, %42, %cst_39 {dimension_numbers = #tpu.dot_dimension_numbers<[1], [0], [0], [1], [0, 0, 1, 1], [], []>} : vector<32x32xf32>, vector<32x8xf32>, vector<32x8xf32> -> vector<32x8xf32>
    %46 = vector.broadcast %44 : vector<32x1xf32> to vector<32x8xf32>
    %47 = arith.addf %45, %46 : vector<32x8xf32>
    %48 = math.tanh %47 : vector<32x8xf32>
    %c0_40 = arith.constant 0 : index
    %c0_41 = arith.constant 0 : index
    %49 = vector.load %arg18[%c0_40, %c0_41] : memref<32x32xf32, #tpu.memory_space<vmem>>, vector<32x32xf32>
    %c0_42 = arith.constant 0 : index
    %c0_43 = arith.constant 0 : index
    %50 = vector.load %arg19[%c0_42, %c0_43] : memref<32x1xf32, #tpu.memory_space<vmem>>, vector<32x1xf32>
    %cst_44 = arith.constant dense<0.000000e+00> : vector<32x8xf32>
    %51 = tpu.matmul %49, %48, %cst_44 {dimension_numbers = #tpu.dot_dimension_numbers<[1], [0], [0], [1], [0, 0, 1, 1], [], []>} : vector<32x32xf32>, vector<32x8xf32>, vector<32x8xf32> -> vector<32x8xf32>
    %52 = vector.broadcast %50 : vector<32x1xf32> to vector<32x8xf32>
    %53 = arith.addf %51, %52 : vector<32x8xf32>
    %54 = math.tanh %53 : vector<32x8xf32>
    %c0_45 = arith.constant 0 : index
    %c0_46 = arith.constant 0 : index
    %55 = vector.load %arg20[%c0_45, %c0_46] : memref<1x32xf32, #tpu.memory_space<vmem>>, vector<1x32xf32>
    %c0_47 = arith.constant 0 : index
    %c0_48 = arith.constant 0 : index
    %56 = vector.load %arg21[%c0_47, %c0_48] : memref<1x1xf32, #tpu.memory_space<vmem>>, vector<1x1xf32>
    %cst_49 = arith.constant dense<0.000000e+00> : vector<1x8xf32>
    %57 = tpu.matmul %55, %54, %cst_49 {dimension_numbers = #tpu.dot_dimension_numbers<[1], [0], [0], [1], [0, 0, 1, 1], [], []>} : vector<1x32xf32>, vector<32x8xf32>, vector<1x8xf32> -> vector<1x8xf32>
    %58 = vector.broadcast %56 : vector<1x1xf32> to vector<1x8xf32>
    %59 = arith.addf %57, %58 : vector<1x8xf32>
    %c0_50 = arith.constant 0 : index
    %c0_51 = arith.constant 0 : index
    %60 = vector.load %arg22[%c0_50, %c0_51] : memref<1x8xf32, #tpu.memory_space<vmem>>, vector<1x8xf32>
    tpu.vector_store %arg22[%c0_50, %c0_51], %59 {strides = array<i32>} : memref<1x8xf32, #tpu.memory_space<vmem>>, vector<1x8xf32>,
    return
  }
  func.func @transform_0(%arg0: i32) -> (i32, i32) {
    %c0_i32 = arith.constant 0 : i32
    %c0_i32_0 = arith.constant 0 : i32
    return %arg0, %c0_i32 : i32, i32
  }
  func.func @transform_1(%arg0: i32) -> (i32, i32) {
    %c0_i32 = arith.constant 0 : i32
    %c0_i32_0 = arith.constant 0 : i32
    %c0_i32_1 = arith.constant 0 : i32
    return %c0_i32, %c0_i32_0 : i32, i32
  }
  func.func @transform_2(%arg0: i32) -> (i32, i32) {
    %c0_i32 = arith.constant 0 : i32
    %c0_i32_0 = arith.constant 0 : i32
    %c0_i32_1 = arith.constant 0 : i32
    return %c0_i32, %c0_i32_0 : i32, i32
  }
  func.func @transform_3(%arg0: i32) -> (i32, i32) {
    %c0_i32 = arith.constant 0 : i32
    %c0_i32_0 = arith.constant 0 : i32
    %c0_i32_1 = arith.constant 0 : i32
    return %c0_i32, %c0_i32_0 : i32, i32
  }
  func.func @transform_4(%arg0: i32) -> (i32, i32) {
    %c0_i32 = arith.constant 0 : i32
    %c0_i32_0 = arith.constant 0 : i32
    %c0_i32_1 = arith.constant 0 : i32
    return %c0_i32, %c0_i32_0 : i32, i32
  }
  func.func @transform_5(%arg0: i32) -> (i32, i32) {
    %c0_i32 = arith.constant 0 : i32
    %c0_i32_0 = arith.constant 0 : i32
    %c0_i32_1 = arith.constant 0 : i32
    return %c0_i32, %c0_i32_0 : i32, i32
  }
  func.func @transform_6(%arg0: i32) -> (i32, i32) {
    %c0_i32 = arith.constant 0 : i32
    %c0_i32_0 = arith.constant 0 : i32
    %c0_i32_1 = arith.constant 0 : i32
    return %c0_i32, %c0_i32_0 : i32, i32
  }
  func.func @transform_7(%arg0: i32) -> (i32, i32) {
    %c0_i32 = arith.constant 0 : i32
    %c0_i32_0 = arith.constant 0 : i32
    %c0_i32_1 = arith.constant 0 : i32
    return %c0_i32, %c0_i32_0 : i32, i32
  }
  func.func @transform_8(%arg0: i32) -> (i32, i32) {
    %c0_i32 = arith.constant 0 : i32
    %c0_i32_0 = arith.constant 0 : i32
    %c0_i32_1 = arith.constant 0 : i32
    return %c0_i32, %c0_i32_0 : i32, i32
  }
  func.func @transform_9(%arg0: i32) -> (i32, i32) {
    %c0_i32 = arith.constant 0 : i32
    %c0_i32_0 = arith.constant 0 : i32
    %c0_i32_1 = arith.constant 0 : i32
    return %c0_i32, %c0_i32_0 : i32, i32
  }
  func.func @transform_10(%arg0: i32) -> (i32, i32) {
    %c0_i32 = arith.constant 0 : i32
    %c0_i32_0 = arith.constant 0 : i32
    %c0_i32_1 = arith.constant 0 : i32
    return %c0_i32, %c0_i32_0 : i32, i32
  }
  func.func @transform_11(%arg0: i32) -> (i32, i32) {
    %c0_i32 = arith.constant 0 : i32
    %c0_i32_0 = arith.constant 0 : i32
    %c0_i32_1 = arith.constant 0 : i32
    return %c0_i32, %c0_i32_0 : i32, i32
  }
  func.func @transform_12(%arg0: i32) -> (i32, i32) {
    %c0_i32 = arith.constant 0 : i32
    %c0_i32_0 = arith.constant 0 : i32
    %c0_i32_1 = arith.constant 0 : i32
    return %c0_i32, %c0_i32_0 : i32, i32
  }
  func.func @transform_13(%arg0: i32) -> (i32, i32) {
    %c0_i32 = arith.constant 0 : i32
    %c0_i32_0 = arith.constant 0 : i32
    %c0_i32_1 = arith.constant 0 : i32
    return %c0_i32, %c0_i32_0 : i32, i32
  }
  func.func @transform_14(%arg0: i32) -> (i32, i32) {
    %c0_i32 = arith.constant 0 : i32
    %c0_i32_0 = arith.constant 0 : i32
    %c0_i32_1 = arith.constant 0 : i32
    return %c0_i32, %c0_i32_0 : i32, i32
  }
  func.func @transform_15(%arg0: i32) -> (i32, i32) {
    %c0_i32 = arith.constant 0 : i32
    %c0_i32_0 = arith.constant 0 : i32
    %c0_i32_1 = arith.constant 0 : i32
    return %c0_i32, %c0_i32_0 : i32, i32
  }
  func.func @transform_16(%arg0: i32) -> (i32, i32) {
    %c0_i32 = arith.constant 0 : i32
    %c0_i32_0 = arith.constant 0 : i32
    %c0_i32_1 = arith.constant 0 : i32
    return %c0_i32, %c0_i32_0 : i32, i32
  }
  func.func @transform_17(%arg0: i32) -> (i32, i32) {
    %c0_i32 = arith.constant 0 : i32
    %c0_i32_0 = arith.constant 0 : i32
    %c0_i32_1 = arith.constant 0 : i32
    return %c0_i32, %c0_i32_0 : i32, i32
  }
  func.func @transform_18(%arg0: i32) -> (i32, i32) {
    %c0_i32 = arith.constant 0 : i32
    %c0_i32_0 = arith.constant 0 : i32
    %c0_i32_1 = arith.constant 0 : i32
    return %c0_i32, %c0_i32_0 : i32, i32
  }
  func.func @transform_19(%arg0: i32) -> (i32, i32) {
    %c0_i32 = arith.constant 0 : i32
    %c0_i32_0 = arith.constant 0 : i32
    %c0_i32_1 = arith.constant 0 : i32
    return %c0_i32, %c0_i32_0 : i32, i32
  }
  func.func @transform_20(%arg0: i32) -> (i32, i32) {
    %c0_i32 = arith.constant 0 : i32
    %c0_i32_0 = arith.constant 0 : i32
    %c0_i32_1 = arith.constant 0 : i32
    return %c0_i32, %c0_i32_0 : i32, i32
  }
  func.func @transform_21(%arg0: i32) -> (i32, i32) {
    %c0_i32 = arith.constant 0 : i32
    %c0_i32_0 = arith.constant 0 : i32
    return %c0_i32, %arg0 : i32, i32
  }
}

</mosaic_0001>

<llo_original>
// kernel: mlp_forward.1
$region0: #{mlp_forward.1}
  #allocation0 [shape = 'u32[]', space=smem, size = 0x4, offset = 0x4, fixed_abs, tag = 'smem constant byte address 0x4 - core index']
  #allocation1 [shape = 'u32[72,128]{1,0:T(1,128)}', space=vmem, size = 0x9000, scoped, tag = 'internal scratch']
  #allocation2 [shape = 'f32[1,1]{1,0:T(1,128)S(1)}', space=vmem, size = 0x200, scoped, tag = 'scoped memory for mlp_forward.1']
  %s0 = inlined_call_operand.vmem [shape: f32[8,2], index: 0, kind: input, shape index: {}]
  %s1 = inlined_call_operand.vmem [shape: f32[64,2], index: 1, kind: input, shape index: {}]
  %s2 = inlined_call_operand.vmem [shape: f32[64,1], index: 2, kind: input, shape index: {}]
  %s3 = inlined_call_operand.vmem [shape: f32[64,64], index: 3, kind: input, shape index: {}]
  %s4 = inlined_call_operand.vmem [shape: f32[64,1], index: 4, kind: input, shape index: {}]
  %s5 = inlined_call_operand.vmem [shape: f32[64,64], index: 5, kind: input, shape index: {}]
  %s6 = inlined_call_operand.vmem [shape: f32[64,1], index: 6, kind: input, shape index: {}]
  %s7 = inlined_call_operand.vmem [shape: f32[64,64], index: 7, kind: input, shape index: {}]
  %s8 = inlined_call_operand.vmem [shape: f32[64,1], index: 8, kind: input, shape index: {}]
  %s9 = inlined_call_operand.vmem [shape: f32[64,64], index: 9, kind: input, shape index: {}]
  %s10 = inlined_call_operand.vmem [shape: f32[64,1], index: 10, kind: input, shape index: {}]
  %s11 = inlined_call_operand.vmem [shape: f32[64,64], index: 11, kind: input, shape index: {}]
  %s12 = inlined_call_operand.vmem [shape: f32[64,1], index: 12, kind: input, shape index: {}]
  %s13 = inlined_call_operand.vmem [shape: f32[32,64], index: 13, kind: input, shape index: {}]
  %s14 = inlined_call_operand.vmem [shape: f32[32,1], index: 14, kind: input, shape index: {}]
  %s15 = inlined_call_operand.vmem [shape: f32[32,32], index: 15, kind: input, shape index: {}]
  %s16 = inlined_call_operand.vmem [shape: f32[32,1], index: 16, kind: input, shape index: {}]
  %s17 = inlined_call_operand.vmem [shape: f32[32,32], index: 17, kind: input, shape index: {}]
  %s18 = inlined_call_operand.vmem [shape: f32[32,1], index: 18, kind: input, shape index: {}]
  %s19 = inlined_call_operand.vmem [shape: f32[1,32], index: 19, kind: input, shape index: {}]
  %s20 = inlined_call_operand.<no memory space> [shape: f32[1,1], index: 20, kind: input, shape index: {}]
  %s21 = inlined_call_operand.hbm [shape: f32[1,8], index: 21, kind: output, shape index: {}]
  %s22 = sld [smem:[#allocation0]]
  $region94: #{mlp_forward.1} parent=0
    _
  %s24 = ssub.s32 1, %s22
  %s25 = scalar_select 0, %s24, %s22
  %v26 = vstv %s20
  %27 = vst [vmem:[#allocation2] sm:$0x1] %v26
  $region1: #{mlp_forward.1} parent=0
    #allocation3 [shape = 'u8[512]{0}', space=vmem, size = 0x400, scoped, tag = 'output window, operand 0, single buffered']
    #allocation4 [shape = 's32[1]{0}', space=sflag, size = 0x4, scoped, tag = 'scoped memory for mlp_forward.1']
    %28 = vsyncpa [#allocation4], 0
    // Predicated region
    $region2: #{mlp_forward.1} parent=1 // pred_check
      _
    $region3: #{mlp_forward.1} parent=1 // pred_check_branch
      %30 = sbr.rel (0) target = $region5
    $region4: #{mlp_forward.1} parent=1 // pred_region
      _
    $region5: #{mlp_forward.1} parent=1 // pred_fallthru
      _
    // Predicated region
    $region6: #{mlp_forward.1} parent=1 // pred_check
      _
    $region7: #{mlp_forward.1} parent=1 // pred_check_branch
      %32 = sbr.rel (0) target = $region9
    $region8: #{mlp_forward.1} parent=1 // pred_region
      _
    $region9: #{mlp_forward.1} parent=1 // pred_fallthru
      _
    // Predicated region
    $region10: #{mlp_forward.1} parent=1 // pred_check
      _
    $region11: #{mlp_forward.1} parent=1 // pred_check_branch
      %34 = sbr.rel (0) target = $region13
    $region12: #{mlp_forward.1} parent=1 // pred_region
      _
    $region13: #{mlp_forward.1} parent=1 // pred_fallthru
      _
    // Predicated region
    $region14: #{mlp_forward.1} parent=1 // pred_check
      _
    $region15: #{mlp_forward.1} parent=1 // pred_check_branch
      %36 = sbr.rel (0) target = $region17
    $region16: #{mlp_forward.1} parent=1 // pred_region
      _
    $region17: #{mlp_forward.1} parent=1 // pred_fallthru
      _
    // Predicated region
    $region18: #{mlp_forward.1} parent=1 // pred_check
      _
    $region19: #{mlp_forward.1} parent=1 // pred_check_branch
      %38 = sbr.rel (0) target = $region21
    $region20: #{mlp_forward.1} parent=1 // pred_region
      _
    $region21: #{mlp_forward.1} parent=1 // pred_fallthru
      _
    // Predicated region
    $region22: #{mlp_forward.1} parent=1 // pred_check
      _
    $region23: #{mlp_forward.1} parent=1 // pred_check_branch
      %40 = sbr.rel (0) target = $region25
    $region24: #{mlp_forward.1} parent=1 // pred_region
      _
    $region25: #{mlp_forward.1} parent=1 // pred_fallthru
      _
    // Predicated region
    $region26: #{mlp_forward.1} parent=1 // pred_check
      _
    $region27: #{mlp_forward.1} parent=1 // pred_check_branch
      %42 = sbr.rel (0) target = $region29
    $region28: #{mlp_forward.1} parent=1 // pred_region
      _
    $region29: #{mlp_forward.1} parent=1 // pred_fallthru
      _
    // Predicated region
    $region30: #{mlp_forward.1} parent=1 // pred_check
      _
    $region31: #{mlp_forward.1} parent=1 // pred_check_branch
      %44 = sbr.rel (0) target = $region33
    $region32: #{mlp_forward.1} parent=1 // pred_region
      _
    $region33: #{mlp_forward.1} parent=1 // pred_fallthru
      _
    // Predicated region
    $region34: #{mlp_forward.1} parent=1 // pred_check
      _
    $region35: #{mlp_forward.1} parent=1 // pred_check_branch
      %46 = sbr.rel (0) target = $region37
    $region36: #{mlp_forward.1} parent=1 // pred_region
      _
    $region37: #{mlp_forward.1} parent=1 // pred_fallthru
      _
    // Predicated region
    $region38: #{mlp_forward.1} parent=1 // pred_check
      _
    $region39: #{mlp_forward.1} parent=1 // pred_check_branch
      %48 = sbr.rel (0) target = $region41
    $region40: #{mlp_forward.1} parent=1 // pred_region
      _
    $region41: #{mlp_forward.1} parent=1 // pred_fallthru
      _
    // Predicated region
    $region42: #{mlp_forward.1} parent=1 // pred_check
      _
    $region43: #{mlp_forward.1} parent=1 // pred_check_branch
      %50 = sbr.rel (0) target = $region45
    $region44: #{mlp_forward.1} parent=1 // pred_region
      _
    $region45: #{mlp_forward.1} parent=1 // pred_fallthru
      _
    // Predicated region
    $region46: #{mlp_forward.1} parent=1 // pred_check
      _
    $region47: #{mlp_forward.1} parent=1 // pred_check_branch
      %52 = sbr.rel (0) target = $region49
    $region48: #{mlp_forward.1} parent=1 // pred_region
      _
    $region49: #{mlp_forward.1} parent=1 // pred_fallthru
      _
    // Predicated region
    $region50: #{mlp_forward.1} parent=1 // pred_check
      _
    $region51: #{mlp_forward.1} parent=1 // pred_check_branch
      %54 = sbr.rel (0) target = $region53
    $region52: #{mlp_forward.1} parent=1 // pred_region
      _
    $region53: #{mlp_forward.1} parent=1 // pred_fallthru
      _
    // Predicated region
    $region54: #{mlp_forward.1} parent=1 // pred_check
      _
    $region55: #{mlp_forward.1} parent=1 // pred_check_branch
      %56 = sbr.rel (0) target = $region57
    $region56: #{mlp_forward.1} parent=1 // pred_region
      _
    $region57: #{mlp_forward.1} parent=1 // pred_fallthru
      _
    // Predicated region
    $region58: #{mlp_forward.1} parent=1 // pred_check
      _
    $region59: #{mlp_forward.1} parent=1 // pred_check_branch
      %58 = sbr.rel (0) target = $region61
    $region60: #{mlp_forward.1} parent=1 // pred_region
      _
    $region61: #{mlp_forward.1} parent=1 // pred_fallthru
      _
    // Predicated region
    $region62: #{mlp_forward.1} parent=1 // pred_check
      _
    $region63: #{mlp_forward.1} parent=1 // pred_check_branch
      %60 = sbr.rel (0) target = $region65
    $region64: #{mlp_forward.1} parent=1 // pred_region
      _
    $region65: #{mlp_forward.1} parent=1 // pred_fallthru
      _
    // Predicated region
    $region66: #{mlp_forward.1} parent=1 // pred_check
      _
    $region67: #{mlp_forward.1} parent=1 // pred_check_branch
      %62 = sbr.rel (0) target = $region69
    $region68: #{mlp_forward.1} parent=1 // pred_region
      _
    $region69: #{mlp_forward.1} parent=1 // pred_fallthru
      _
    // Predicated region
    $region70: #{mlp_forward.1} parent=1 // pred_check
      _
    $region71: #{mlp_forward.1} parent=1 // pred_check_branch
      %64 = sbr.rel (0) target = $region73
    $region72: #{mlp_forward.1} parent=1 // pred_region
      _
    $region73: #{mlp_forward.1} parent=1 // pred_fallthru
      _
    // Predicated region
    $region74: #{mlp_forward.1} parent=1 // pred_check
      _
    $region75: #{mlp_forward.1} parent=1 // pred_check_branch
      %66 = sbr.rel (0) target = $region77
    $region76: #{mlp_forward.1} parent=1 // pred_region
      _
    $region77: #{mlp_forward.1} parent=1 // pred_fallthru
      _
    // Predicated region
    $region78: #{mlp_forward.1} parent=1 // pred_check
      _
    $region79: #{mlp_forward.1} parent=1 // pred_check_branch
      %68 = sbr.rel (0) target = $region81
    $region80: #{mlp_forward.1} parent=1 // pred_region
      _
    $region81: #{mlp_forward.1} parent=1 // pred_fallthru
      _
    // Predicated region
    $region82: #{mlp_forward.1} parent=1 // pred_check
      _
    $region83: #{mlp_forward.1} parent=1 // pred_check_branch
      %70 = sbr.rel (0) target = $region85
    $region84: #{mlp_forward.1} parent=1 // pred_region
      _
    $region85: #{mlp_forward.1} parent=1 // pred_fallthru
      _
    %v71 = vld [vmem:[%s1] sm:$0xff]
    %v72 = vld [vmem:[%s1 + $0x8] sm:$0xff]
    %v73 = vld [vmem:[%s1 + $0x10] sm:$0xff]
    %v74 = vld [vmem:[%s1 + $0x18] sm:$0xff]
    %v75 = vld [vmem:[%s1 + $0x20] sm:$0xff]
    %v76 = vld [vmem:[%s1 + $0x28] sm:$0xff]
    %v77 = vld [vmem:[%s1 + $0x30] sm:$0xff]
    %v78 = vld [vmem:[%s1 + $0x38] sm:$0xff]
    %v79 = vld [vmem:[%s2] sm:$0xff]
    %v80 = vld [vmem:[%s2 + $0x8] sm:$0xff]
    %v81 = vld [vmem:[%s2 + $0x10] sm:$0xff]
    %v82 = vld [vmem:[%s2 + $0x18] sm:$0xff]
    %v83 = vld [vmem:[%s2 + $0x20] sm:$0xff]
    %v84 = vld [vmem:[%s2 + $0x28] sm:$0xff]
    %v85 = vld [vmem:[%s2 + $0x30] sm:$0xff]
    %v86 = vld [vmem:[%s2 + $0x38] sm:$0xff]
    %v87 = vld [vmem:[%s0] sm:$0xff]
    %89 = vset.pattern.permute.xlu0 0
    %90 = vperm.xlu0 %89, %v79
    %v91 = vpop.permute.xlu0 %90
    %94 = vset.pattern.permute.xlu0 0
    %95 = vperm.xlu0 %94, %v80
    %v96 = vpop.permute.xlu0 %95
    %99 = vset.pattern.permute.xlu0 0
    %100 = vperm.xlu0 %99, %v81
    %v101 = vpop.permute.xlu0 %100
    %104 = vset.pattern.permute.xlu0 0
    %105 = vperm.xlu0 %104, %v82
    %v106 = vpop.permute.xlu0 %105
    %109 = vset.pattern.permute.xlu0 0
    %110 = vperm.xlu0 %109, %v83
    %v111 = vpop.permute.xlu0 %110
    %114 = vset.pattern.permute.xlu0 0
    %115 = vperm.xlu0 %114, %v84
    %v116 = vpop.permute.xlu0 %115
    %119 = vset.pattern.permute.xlu0 0
    %120 = vperm.xlu0 %119, %v85
    %v121 = vpop.permute.xlu0 %120
    %124 = vset.pattern.permute.xlu0 0
    %125 = vperm.xlu0 %124, %v86
    %v126 = vpop.permute.xlu0 %125
    %vm128 = vcmask 15360
    %v130 = vsel %vm128, %v71, 0
    %v133 = vsel %vm128, %v72, 0
    %v136 = vsel %vm128, %v73, 0
    %v139 = vsel %vm128, %v74, 0
    %v142 = vsel %vm128, %v75, 0
    %v145 = vsel %vm128, %v76, 0
    %v148 = vsel %vm128, %v77, 0
    %v151 = vsel %vm128, %v78, 0
    %v154 = vsel %vm128, %v87, 0
    %156 = vmatpush.xpose.msra.mxu0 0.0
    %157 = vmatpush.xpose.msra.mxu0 0.0
    %158 = vmatpush.xpose.msra.mxu0 0.0
    %159 = vmatpush.xpose.msra.mxu0 0.0
    %160 = vmatpush.xpose.msra.mxu0 0.0
    %161 = vmatpush.xpose.msra.mxu0 0.0
    %162 = vmatpush.xpose.msra.mxu0 0.0
    %163 = vmatpush.xpose.msra.mxu0 0.0
    %164 = vmatpush.xpose.msra.mxu0 0.0
    %165 = vmatpush.xpose.msra.mxu0 0.0
    %166 = vmatpush.xpose.msra.mxu0 0.0
    %167 = vmatpush.xpose.msra.mxu0 0.0
    %168 = vmatpush.xpose.msra.mxu0 0.0
    %169 = vmatpush.xpose.msra.mxu0 0.0
    %170 = vmatpush.xpose.msra.mxu0 0.0
    %171 = vmatpush.xpose.msra.mxu0 %v154
    %172 = vmatmul.f32.gmra.mxu0 %v130
    %v173 = vpop.f32.mrf.mxu0
    %v174 = vadd.f32 %v91, %v173
    %175 = vmatmul.f32.gmra.mxu0 %v133
    %v176 = vpop.f32.mrf.mxu0
    %v177 = vadd.f32 %v96, %v176
    %178 = vmatmul.f32.gmra.mxu0 %v136
    %v179 = vpop.f32.mrf.mxu0
    %v180 = vadd.f32 %v101, %v179
    %181 = vmatmul.f32.gmra.mxu0 %v139
    %v182 = vpop.f32.mrf.mxu0
    %v183 = vadd.f32 %v106, %v182
    %184 = vmatmul.f32.gmra.mxu0 %v142
    %v185 = vpop.f32.mrf.mxu0
    %v186 = vadd.f32 %v111, %v185
    %187 = vmatmul.f32.gmra.mxu0 %v145
    %v188 = vpop.f32.mrf.mxu0
    %v189 = vadd.f32 %v116, %v188
    %190 = vmatmul.f32.gmra.mxu0 %v148
    %v191 = vpop.f32.mrf.mxu0
    %v192 = vadd.f32 %v121, %v191
    %193 = vmatmul.f32.gmra.mxu0 %v151
    %v194 = vpop.f32.mrf.mxu0
    %v195 = vadd.f32 %v126, %v194
    %196 = vdwg.mxu0
    %v197 = vtanh.pop %v174
    %v198 = vtanh.pop %v177
    %v199 = vtanh.pop %v180
    %v200 = vtanh.pop %v183
    %v201 = vtanh.pop %v186
    %v202 = vtanh.pop %v189
    %v203 = vtanh.pop %v192
    %v204 = vtanh.pop %v195
    %v205 = vld [vmem:[%s3] sm:$0xff]
    %v206 = vld [vmem:[%s3 + $0x8] sm:$0xff]
    %v207 = vld [vmem:[%s3 + $0x10] sm:$0xff]
    %v208 = vld [vmem:[%s3 + $0x18] sm:$0xff]
    %v209 = vld [vmem:[%s3 + $0x20] sm:$0xff]
    %v210 = vld [vmem:[%s3 + $0x28] sm:$0xff]
    %v211 = vld [vmem:[%s3 + $0x30] sm:$0xff]
    %v212 = vld [vmem:[%s3 + $0x38] sm:$0xff]
    %v213 = vld [vmem:[%s4] sm:$0xff]
    %v214 = vld [vmem:[%s4 + $0x8] sm:$0xff]
    %v215 = vld [vmem:[%s4 + $0x10] sm:$0xff]
    %v216 = vld [vmem:[%s4 + $0x18] sm:$0xff]
    %v217 = vld [vmem:[%s4 + $0x20] sm:$0xff]
    %v218 = vld [vmem:[%s4 + $0x28] sm:$0xff]
    %v219 = vld [vmem:[%s4 + $0x30] sm:$0xff]
    %v220 = vld [vmem:[%s4 + $0x38] sm:$0xff]
    %222 = vset.pattern.permute.xlu0 0
    %223 = vperm.xlu0 %222, %v213
    %v224 = vpop.permute.xlu0 %223
    %227 = vset.pattern.permute.xlu0 0
    %228 = vperm.xlu0 %227, %v214
    %v229 = vpop.permute.xlu0 %228
    %232 = vset.pattern.permute.xlu0 0
    %233 = vperm.xlu0 %232, %v215
    %v234 = vpop.permute.xlu0 %233
    %237 = vset.pattern.permute.xlu0 0
    %238 = vperm.xlu0 %237, %v216
    %v239 = vpop.permute.xlu0 %238
    %242 = vset.pattern.permute.xlu0 0
    %243 = vperm.xlu0 %242, %v217
    %v244 = vpop.permute.xlu0 %243
    %247 = vset.pattern.permute.xlu0 0
    %248 = vperm.xlu0 %247, %v218
    %v249 = vpop.permute.xlu0 %248
    %252 = vset.pattern.permute.xlu0 0
    %253 = vperm.xlu0 %252, %v219
    %v254 = vpop.permute.xlu0 %253
    %257 = vset.pattern.permute.xlu0 0
    %258 = vperm.xlu0 %257, %v220
    %v259 = vpop.permute.xlu0 %258
    %vm261 = vcmask 523264
    %v263 = vsel %vm261, %v205, 0
    %v266 = vsel %vm261, %v206, 0
    %v269 = vsel %vm261, %v207, 0
    %v272 = vsel %vm261, %v208, 0
    %v275 = vsel %vm261, %v209, 0
    %v278 = vsel %vm261, %v210, 0
    %v281 = vsel %vm261, %v211, 0
    %v284 = vsel %vm261, %v212, 0
    %286 = vmatpush.msra.mxu0 0.0
    %287 = vmatpush.msra.mxu0 0.0
    %288 = vmatpush.msra.mxu0 0.0
    %289 = vmatpush.msra.mxu0 0.0
    %290 = vmatpush.msra.mxu0 0.0
    %291 = vmatpush.msra.mxu0 0.0
    %292 = vmatpush.msra.mxu0 0.0
    %293 = vmatpush.msra.mxu0 0.0
    %294 = vmatpush.msra.mxu0 %v204
    %295 = vmatpush.msra.mxu0 %v203
    %296 = vmatpush.msra.mxu0 %v202
    %297 = vmatpush.msra.mxu0 %v201
    %298 = vmatpush.msra.mxu0 %v200
    %299 = vmatpush.msra.mxu0 %v199
    %300 = vmatpush.msra.mxu0 %v198
    %301 = vmatpush.msra.mxu0 %v197
    %302 = vmatmul.f32.gmra.mxu0 %v263
    %v303 = vpop.f32.mrf.mxu0
    %v304 = vadd.f32 %v224, %v303
    %305 = vmatmul.f32.gmra.mxu0 %v266
    %v306 = vpop.f32.mrf.mxu0
    %v307 = vadd.f32 %v229, %v306
    %308 = vmatmul.f32.gmra.mxu0 %v269
    %v309 = vpop.f32.mrf.mxu0
    %v310 = vadd.f32 %v234, %v309
    %311 = vmatmul.f32.gmra.mxu0 %v272
    %v312 = vpop.f32.mrf.mxu0
    %v313 = vadd.f32 %v239, %v312
    %314 = vmatmul.f32.gmra.mxu0 %v275
    %v315 = vpop.f32.mrf.mxu0
    %v316 = vadd.f32 %v244, %v315
    %317 = vmatmul.f32.gmra.mxu0 %v278
    %v318 = vpop.f32.mrf.mxu0
    %v319 = vadd.f32 %v249, %v318
    %320 = vmatmul.f32.gmra.mxu0 %v281
    %v321 = vpop.f32.mrf.mxu0
    %v322 = vadd.f32 %v254, %v321
    %323 = vmatmul.f32.gmra.mxu0 %v284
    %v324 = vpop.f32.mrf.mxu0
    %v325 = vadd.f32 %v259, %v324
    %326 = vdwg.mxu0
    %v327 = vtanh.pop %v304
    %v328 = vtanh.pop %v307
    %v329 = vtanh.pop %v310
    %v330 = vtanh.pop %v313
    %v331 = vtanh.pop %v316
    %v332 = vtanh.pop %v319
    %v333 = vtanh.pop %v322
    %v334 = vtanh.pop %v325
    %v335 = vld [vmem:[%s5] sm:$0xff]
    %v336 = vld [vmem:[%s5 + $0x8] sm:$0xff]
    %v337 = vld [vmem:[%s5 + $0x10] sm:$0xff]
    %v338 = vld [vmem:[%s5 + $0x18] sm:$0xff]
    %v339 = vld [vmem:[%s5 + $0x20] sm:$0xff]
    %v340 = vld [vmem:[%s5 + $0x28] sm:$0xff]
    %v341 = vld [vmem:[%s5 + $0x30] sm:$0xff]
    %v342 = vld [vmem:[%s5 + $0x38] sm:$0xff]
    %v343 = vld [vmem:[%s6] sm:$0xff]
    %v344 = vld [vmem:[%s6 + $0x8] sm:$0xff]
    %v345 = vld [vmem:[%s6 + $0x10] sm:$0xff]
    %v346 = vld [vmem:[%s6 + $0x18] sm:$0xff]
    %v347 = vld [vmem:[%s6 + $0x20] sm:$0xff]
    %v348 = vld [vmem:[%s6 + $0x28] sm:$0xff]
    %v349 = vld [vmem:[%s6 + $0x30] sm:$0xff]
    %v350 = vld [vmem:[%s6 + $0x38] sm:$0xff]
    %352 = vset.pattern.permute.xlu0 0
    %353 = vperm.xlu0 %352, %v343
    %v354 = vpop.permute.xlu0 %353
    %357 = vset.pattern.permute.xlu0 0
    %358 = vperm.xlu0 %357, %v344
    %v359 = vpop.permute.xlu0 %358
    %362 = vset.pattern.permute.xlu0 0
    %363 = vperm.xlu0 %362, %v345
    %v364 = vpop.permute.xlu0 %363
    %367 = vset.pattern.permute.xlu0 0
    %368 = vperm.xlu0 %367, %v346
    %v369 = vpop.permute.xlu0 %368
    %372 = vset.pattern.permute.xlu0 0
    %373 = vperm.xlu0 %372, %v347
    %v374 = vpop.permute.xlu0 %373
    %377 = vset.pattern.permute.xlu0 0
    %378 = vperm.xlu0 %377, %v348
    %v379 = vpop.permute.xlu0 %378
    %382 = vset.pattern.permute.xlu0 0
    %383 = vperm.xlu0 %382, %v349
    %v384 = vpop.permute.xlu0 %383
    %387 = vset.pattern.permute.xlu0 0
    %388 = vperm.xlu0 %387, %v350
    %v389 = vpop.permute.xlu0 %388
    %v392 = vsel %vm261, %v335, 0
    %v395 = vsel %vm261, %v336, 0
    %v398 = vsel %vm261, %v337, 0
    %v401 = vsel %vm261, %v338, 0
    %v404 = vsel %vm261, %v339, 0
    %v407 = vsel %vm261, %v340, 0
    %v410 = vsel %vm261, %v341, 0
    %v413 = vsel %vm261, %v342, 0
    %415 = vmatpush.msra.mxu0 0.0
    %416 = vmatpush.msra.mxu0 0.0
    %417 = vmatpush.msra.mxu0 0.0
    %418 = vmatpush.msra.mxu0 0.0
    %419 = vmatpush.msra.mxu0 0.0
    %420 = vmatpush.msra.mxu0 0.0
    %421 = vmatpush.msra.mxu0 0.0
    %422 = vmatpush.msra.mxu0 0.0
    %423 = vmatpush.msra.mxu0 %v334
    %424 = vmatpush.msra.mxu0 %v333
    %425 = vmatpush.msra.mxu0 %v332
    %426 = vmatpush.msra.mxu0 %v331
    %427 = vmatpush.msra.mxu0 %v330
    %428 = vmatpush.msra.mxu0 %v329
    %429 = vmatpush.msra.mxu0 %v328
    %430 = vmatpush.msra.mxu0 %v327
    %431 = vmatmul.f32.gmra.mxu0 %v392
    %v432 = vpop.f32.mrf.mxu0
    %v433 = vadd.f32 %v354, %v432
    %434 = vmatmul.f32.gmra.mxu0 %v395
    %v435 = vpop.f32.mrf.mxu0
    %v436 = vadd.f32 %v359, %v435
    %437 = vmatmul.f32.gmra.mxu0 %v398
    %v438 = vpop.f32.mrf.mxu0
    %v439 = vadd.f32 %v364, %v438
    %440 = vmatmul.f32.gmra.mxu0 %v401
    %v441 = vpop.f32.mrf.mxu0
    %v442 = vadd.f32 %v369, %v441
    %443 = vmatmul.f32.gmra.mxu0 %v404
    %v444 = vpop.f32.mrf.mxu0
    %v445 = vadd.f32 %v374, %v444
    %446 = vmatmul.f32.gmra.mxu0 %v407
    %v447 = vpop.f32.mrf.mxu0
    %v448 = vadd.f32 %v379, %v447
    %449 = vmatmul.f32.gmra.mxu0 %v410
    %v450 = vpop.f32.mrf.mxu0
    %v451 = vadd.f32 %v384, %v450
    %452 = vmatmul.f32.gmra.mxu0 %v413
    %v453 = vpop.f32.mrf.mxu0
    %v454 = vadd.f32 %v389, %v453
    %455 = vdwg.mxu0
    %v456 = vtanh.pop %v433
    %v457 = vtanh.pop %v436
    %v458 = vtanh.pop %v439
    %v459 = vtanh.pop %v442
    %v460 = vtanh.pop %v445
    %v461 = vtanh.pop %v448
    %v462 = vtanh.pop %v451
    %v463 = vtanh.pop %v454
    %v464 = vld [vmem:[%s7] sm:$0xff]
    %v465 = vld [vmem:[%s7 + $0x8] sm:$0xff]
    %v466 = vld [vmem:[%s7 + $0x10] sm:$0xff]
    %v467 = vld [vmem:[%s7 + $0x18] sm:$0xff]
    %v468 = vld [vmem:[%s7 + $0x20] sm:$0xff]
    %v469 = vld [vmem:[%s7 + $0x28] sm:$0xff]
    %v470 = vld [vmem:[%s7 + $0x30] sm:$0xff]
    %v471 = vld [vmem:[%s7 + $0x38] sm:$0xff]
    %v472 = vld [vmem:[%s8] sm:$0xff]
    %v473 = vld [vmem:[%s8 + $0x8] sm:$0xff]
    %v474 = vld [vmem:[%s8 + $0x10] sm:$0xff]
    %v475 = vld [vmem:[%s8 + $0x18] sm:$0xff]
    %v476 = vld [vmem:[%s8 + $0x20] sm:$0xff]
    %v477 = vld [vmem:[%s8 + $0x28] sm:$0xff]
    %v478 = vld [vmem:[%s8 + $0x30] sm:$0xff]
    %v479 = vld [vmem:[%s8 + $0x38] sm:$0xff]
    %481 = vset.pattern.permute.xlu0 0
    %482 = vperm.xlu0 %481, %v472
    %v483 = vpop.permute.xlu0 %482
    %486 = vset.pattern.permute.xlu0 0
    %487 = vperm.xlu0 %486, %v473
    %v488 = vpop.permute.xlu0 %487
    %491 = vset.pattern.permute.xlu0 0
    %492 = vperm.xlu0 %491, %v474
    %v493 = vpop.permute.xlu0 %492
    %496 = vset.pattern.permute.xlu0 0
    %497 = vperm.xlu0 %496, %v475
    %v498 = vpop.permute.xlu0 %497
    %501 = vset.pattern.permute.xlu0 0
    %502 = vperm.xlu0 %501, %v476
    %v503 = vpop.permute.xlu0 %502
    %506 = vset.pattern.permute.xlu0 0
    %507 = vperm.xlu0 %506, %v477
    %v508 = vpop.permute.xlu0 %507
    %511 = vset.pattern.permute.xlu0 0
    %512 = vperm.xlu0 %511, %v478
    %v513 = vpop.permute.xlu0 %512
    %516 = vset.pattern.permute.xlu0 0
    %517 = vperm.xlu0 %516, %v479
    %v518 = vpop.permute.xlu0 %517
    %v521 = vsel %vm261, %v464, 0
    %v524 = vsel %vm261, %v465, 0
    %v527 = vsel %vm261, %v466, 0
    %v530 = vsel %vm261, %v467, 0
    %v533 = vsel %vm261, %v468, 0
    %v536 = vsel %vm261, %v469, 0
    %v539 = vsel %vm261, %v470, 0
    %v542 = vsel %vm261, %v471, 0
    %544 = vmatpush.msra.mxu0 0.0
    %545 = vmatpush.msra.mxu0 0.0
    %546 = vmatpush.msra.mxu0 0.0
    %547 = vmatpush.msra.mxu0 0.0
    %548 = vmatpush.msra.mxu0 0.0
    %549 = vmatpush.msra.mxu0 0.0
    %550 = vmatpush.msra.mxu0 0.0
    %551 = vmatpush.msra.mxu0 0.0
    %552 = vmatpush.msra.mxu0 %v463
    %553 = vmatpush.msra.mxu0 %v462
    %554 = vmatpush.msra.mxu0 %v461
    %555 = vmatpush.msra.mxu0 %v460
    %556 = vmatpush.msra.mxu0 %v459
    %557 = vmatpush.msra.mxu0 %v458
    %558 = vmatpush.msra.mxu0 %v457
    %559 = vmatpush.msra.mxu0 %v456
    %560 = vmatmul.f32.gmra.mxu0 %v521
    %v561 = vpop.f32.mrf.mxu0
    %v562 = vadd.f32 %v483, %v561
    %563 = vmatmul.f32.gmra.mxu0 %v524
    %v564 = vpop.f32.mrf.mxu0
    %v565 = vadd.f32 %v488, %v564
    %566 = vmatmul.f32.gmra.mxu0 %v527
    %v567 = vpop.f32.mrf.mxu0
    %v568 = vadd.f32 %v493, %v567
    %569 = vmatmul.f32.gmra.mxu0 %v530
    %v570 = vpop.f32.mrf.mxu0
    %v571 = vadd.f32 %v498, %v570
    %572 = vmatmul.f32.gmra.mxu0 %v533
    %v573 = vpop.f32.mrf.mxu0
    %v574 = vadd.f32 %v503, %v573
    %575 = vmatmul.f32.gmra.mxu0 %v536
    %v576 = vpop.f32.mrf.mxu0
    %v577 = vadd.f32 %v508, %v576
    %578 = vmatmul.f32.gmra.mxu0 %v539
    %v579 = vpop.f32.mrf.mxu0
    %v580 = vadd.f32 %v513, %v579
    %581 = vmatmul.f32.gmra.mxu0 %v542
    %v582 = vpop.f32.mrf.mxu0
    %v583 = vadd.f32 %v518, %v582
    %584 = vdwg.mxu0
    %v585 = vtanh.pop %v562
    %v586 = vtanh.pop %v565
    %v587 = vtanh.pop %v568
    %v588 = vtanh.pop %v571
    %v589 = vtanh.pop %v574
    %v590 = vtanh.pop %v577
    %v591 = vtanh.pop %v580
    %v592 = vtanh.pop %v583
    %v593 = vld [vmem:[%s9] sm:$0xff]
    %v594 = vld [vmem:[%s9 + $0x8] sm:$0xff]
    %v595 = vld [vmem:[%s9 + $0x10] sm:$0xff]
    %v596 = vld [vmem:[%s9 + $0x18] sm:$0xff]
    %v597 = vld [vmem:[%s9 + $0x20] sm:$0xff]
    %v598 = vld [vmem:[%s9 + $0x28] sm:$0xff]
    %v599 = vld [vmem:[%s9 + $0x30] sm:$0xff]
    %v600 = vld [vmem:[%s9 + $0x38] sm:$0xff]
    %v601 = vld [vmem:[%s10] sm:$0xff]
    %v602 = vld [vmem:[%s10 + $0x8] sm:$0xff]
    %v603 = vld [vmem:[%s10 + $0x10] sm:$0xff]
    %v604 = vld [vmem:[%s10 + $0x18] sm:$0xff]
    %v605 = vld [vmem:[%s10 + $0x20] sm:$0xff]
    %v606 = vld [vmem:[%s10 + $0x28] sm:$0xff]
    %v607 = vld [vmem:[%s10 + $0x30] sm:$0xff]
    %v608 = vld [vmem:[%s10 + $0x38] sm:$0xff]
    %610 = vset.pattern.permute.xlu0 0
    %611 = vperm.xlu0 %610, %v601
    %v612 = vpop.permute.xlu0 %611
    %615 = vset.pattern.permute.xlu0 0
    %616 = vperm.xlu0 %615, %v602
    %v617 = vpop.permute.xlu0 %616
    %620 = vset.pattern.permute.xlu0 0
    %621 = vperm.xlu0 %620, %v603
    %v622 = vpop.permute.xlu0 %621
    %625 = vset.pattern.permute.xlu0 0
    %626 = vperm.xlu0 %625, %v604
    %v627 = vpop.permute.xlu0 %626
    %630 = vset.pattern.permute.xlu0 0
    %631 = vperm.xlu0 %630, %v605
    %v632 = vpop.permute.xlu0 %631
    %635 = vset.pattern.permute.xlu0 0
    %636 = vperm.xlu0 %635, %v606
    %v637 = vpop.permute.xlu0 %636
    %640 = vset.pattern.permute.xlu0 0
    %641 = vperm.xlu0 %640, %v607
    %v642 = vpop.permute.xlu0 %641
    %645 = vset.pattern.permute.xlu0 0
    %646 = vperm.xlu0 %645, %v608
    %v647 = vpop.permute.xlu0 %646
    %v650 = vsel %vm261, %v593, 0
    %v653 = vsel %vm261, %v594, 0
    %v656 = vsel %vm261, %v595, 0
    %v659 = vsel %vm261, %v596, 0
    %v662 = vsel %vm261, %v597, 0
    %v665 = vsel %vm261, %v598, 0
    %v668 = vsel %vm261, %v599, 0
    %v671 = vsel %vm261, %v600, 0
    %673 = vmatpush.msra.mxu0 0.0
    %674 = vmatpush.msra.mxu0 0.0
    %675 = vmatpush.msra.mxu0 0.0
    %676 = vmatpush.msra.mxu0 0.0
    %677 = vmatpush.msra.mxu0 0.0
    %678 = vmatpush.msra.mxu0 0.0
    %679 = vmatpush.msra.mxu0 0.0
    %680 = vmatpush.msra.mxu0 0.0
    %681 = vmatpush.msra.mxu0 %v592
    %682 = vmatpush.msra.mxu0 %v591
    %683 = vmatpush.msra.mxu0 %v590
    %684 = vmatpush.msra.mxu0 %v589
    %685 = vmatpush.msra.mxu0 %v588
    %686 = vmatpush.msra.mxu0 %v587
    %687 = vmatpush.msra.mxu0 %v586
    %688 = vmatpush.msra.mxu0 %v585
    %689 = vmatmul.f32.gmra.mxu0 %v650
    %v690 = vpop.f32.mrf.mxu0
    %v691 = vadd.f32 %v612, %v690
    %692 = vmatmul.f32.gmra.mxu0 %v653
    %v693 = vpop.f32.mrf.mxu0
    %v694 = vadd.f32 %v617, %v693
    %695 = vmatmul.f32.gmra.mxu0 %v656
    %v696 = vpop.f32.mrf.mxu0
    %v697 = vadd.f32 %v622, %v696
    %698 = vmatmul.f32.gmra.mxu0 %v659
    %v699 = vpop.f32.mrf.mxu0
    %v700 = vadd.f32 %v627, %v699
    %701 = vmatmul.f32.gmra.mxu0 %v662
    %v702 = vpop.f32.mrf.mxu0
    %v703 = vadd.f32 %v632, %v702
    %704 = vmatmul.f32.gmra.mxu0 %v665
    %v705 = vpop.f32.mrf.mxu0
    %v706 = vadd.f32 %v637, %v705
    %707 = vmatmul.f32.gmra.mxu0 %v668
    %v708 = vpop.f32.mrf.mxu0
    %v709 = vadd.f32 %v642, %v708
    %710 = vmatmul.f32.gmra.mxu0 %v671
    %v711 = vpop.f32.mrf.mxu0
    %v712 = vadd.f32 %v647, %v711
    %713 = vdwg.mxu0
    %v714 = vtanh.pop %v691
    %v715 = vtanh.pop %v694
    %v716 = vtanh.pop %v697
    %v717 = vtanh.pop %v700
    %v718 = vtanh.pop %v703
    %v719 = vtanh.pop %v706
    %v720 = vtanh.pop %v709
    %v721 = vtanh.pop %v712
    %v722 = vld [vmem:[%s11] sm:$0xff]
    %v723 = vld [vmem:[%s11 + $0x8] sm:$0xff]
    %v724 = vld [vmem:[%s11 + $0x10] sm:$0xff]
    %v725 = vld [vmem:[%s11 + $0x18] sm:$0xff]
    %v726 = vld [vmem:[%s11 + $0x20] sm:$0xff]
    %v727 = vld [vmem:[%s11 + $0x28] sm:$0xff]
    %v728 = vld [vmem:[%s11 + $0x30] sm:$0xff]
    %v729 = vld [vmem:[%s11 + $0x38] sm:$0xff]
    %v730 = vld [vmem:[%s12] sm:$0xff]
    %v731 = vld [vmem:[%s12 + $0x8] sm:$0xff]
    %v732 = vld [vmem:[%s12 + $0x10] sm:$0xff]
    %v733 = vld [vmem:[%s12 + $0x18] sm:$0xff]
    %v734 = vld [vmem:[%s12 + $0x20] sm:$0xff]
    %v735 = vld [vmem:[%s12 + $0x28] sm:$0xff]
    %v736 = vld [vmem:[%s12 + $0x30] sm:$0xff]
    %v737 = vld [vmem:[%s12 + $0x38] sm:$0xff]
    %739 = vset.pattern.permute.xlu0 0
    %740 = vperm.xlu0 %739, %v730
    %v741 = vpop.permute.xlu0 %740
    %744 = vset.pattern.permute.xlu0 0
    %745 = vperm.xlu0 %744, %v731
    %v746 = vpop.permute.xlu0 %745
    %749 = vset.pattern.permute.xlu0 0
    %750 = vperm.xlu0 %749, %v732
    %v751 = vpop.permute.xlu0 %750
    %754 = vset.pattern.permute.xlu0 0
    %755 = vperm.xlu0 %754, %v733
    %v756 = vpop.permute.xlu0 %755
    %759 = vset.pattern.permute.xlu0 0
    %760 = vperm.xlu0 %759, %v734
    %v761 = vpop.permute.xlu0 %760
    %764 = vset.pattern.permute.xlu0 0
    %765 = vperm.xlu0 %764, %v735
    %v766 = vpop.permute.xlu0 %765
    %769 = vset.pattern.permute.xlu0 0
    %770 = vperm.xlu0 %769, %v736
    %v771 = vpop.permute.xlu0 %770
    %774 = vset.pattern.permute.xlu0 0
    %775 = vperm.xlu0 %774, %v737
    %v776 = vpop.permute.xlu0 %775
    %v779 = vsel %vm261, %v722, 0
    %v782 = vsel %vm261, %v723, 0
    %v785 = vsel %vm261, %v724, 0
    %v788 = vsel %vm261, %v725, 0
    %v791 = vsel %vm261, %v726, 0
    %v794 = vsel %vm261, %v727, 0
    %v797 = vsel %vm261, %v728, 0
    %v800 = vsel %vm261, %v729, 0
    %802 = vmatpush.msra.mxu0 0.0
    %803 = vmatpush.msra.mxu0 0.0
    %804 = vmatpush.msra.mxu0 0.0
    %805 = vmatpush.msra.mxu0 0.0
    %806 = vmatpush.msra.mxu0 0.0
    %807 = vmatpush.msra.mxu0 0.0
    %808 = vmatpush.msra.mxu0 0.0
    %809 = vmatpush.msra.mxu0 0.0
    %810 = vmatpush.msra.mxu0 %v721
    %811 = vmatpush.msra.mxu0 %v720
    %812 = vmatpush.msra.mxu0 %v719
    %813 = vmatpush.msra.mxu0 %v718
    %814 = vmatpush.msra.mxu0 %v717
    %815 = vmatpush.msra.mxu0 %v716
    %816 = vmatpush.msra.mxu0 %v715
    %817 = vmatpush.msra.mxu0 %v714
    %818 = vmatmul.f32.gmra.mxu0 %v779
    %v819 = vpop.f32.mrf.mxu0
    %v820 = vadd.f32 %v741, %v819
    %821 = vmatmul.f32.gmra.mxu0 %v782
    %v822 = vpop.f32.mrf.mxu0
    %v823 = vadd.f32 %v746, %v822
    %824 = vmatmul.f32.gmra.mxu0 %v785
    %v825 = vpop.f32.mrf.mxu0
    %v826 = vadd.f32 %v751, %v825
    %827 = vmatmul.f32.gmra.mxu0 %v788
    %v828 = vpop.f32.mrf.mxu0
    %v829 = vadd.f32 %v756, %v828
    %830 = vmatmul.f32.gmra.mxu0 %v791
    %v831 = vpop.f32.mrf.mxu0
    %v832 = vadd.f32 %v761, %v831
    %833 = vmatmul.f32.gmra.mxu0 %v794
    %v834 = vpop.f32.mrf.mxu0
    %v835 = vadd.f32 %v766, %v834
    %836 = vmatmul.f32.gmra.mxu0 %v797
    %v837 = vpop.f32.mrf.mxu0
    %v838 = vadd.f32 %v771, %v837
    %839 = vmatmul.f32.gmra.mxu0 %v800
    %v840 = vpop.f32.mrf.mxu0
    %v841 = vadd.f32 %v776, %v840
    %842 = vdwg.mxu0
    %v843 = vtanh.pop %v820
    %v844 = vtanh.pop %v823
    %v845 = vtanh.pop %v826
    %v846 = vtanh.pop %v829
    %v847 = vtanh.pop %v832
    %v848 = vtanh.pop %v835
    %v849 = vtanh.pop %v838
    %v850 = vtanh.pop %v841
    %v851 = vld [vmem:[%s13] sm:$0xff]
    %v852 = vld [vmem:[%s13 + $0x8] sm:$0xff]
    %v853 = vld [vmem:[%s13 + $0x10] sm:$0xff]
    %v854 = vld [vmem:[%s13 + $0x18] sm:$0xff]
    %v855 = vld [vmem:[%s14] sm:$0xff]
    %v856 = vld [vmem:[%s14 + $0x8] sm:$0xff]
    %v857 = vld [vmem:[%s14 + $0x10] sm:$0xff]
    %v858 = vld [vmem:[%s14 + $0x18] sm:$0xff]
    %860 = vset.pattern.permute.xlu0 0
    %861 = vperm.xlu0 %860, %v855
    %v862 = vpop.permute.xlu0 %861
    %865 = vset.pattern.permute.xlu0 0
    %866 = vperm.xlu0 %865, %v856
    %v867 = vpop.permute.xlu0 %866
    %870 = vset.pattern.permute.xlu0 0
    %871 = vperm.xlu0 %870, %v857
    %v872 = vpop.permute.xlu0 %871
    %875 = vset.pattern.permute.xlu0 0
    %876 = vperm.xlu0 %875, %v858
    %v877 = vpop.permute.xlu0 %876
    %v880 = vsel %vm261, %v851, 0
    %v883 = vsel %vm261, %v852, 0
    %v886 = vsel %vm261, %v853, 0
    %v889 = vsel %vm261, %v854, 0
    %891 = vmatpush.msra.mxu0 0.0
    %892 = vmatpush.msra.mxu0 0.0
    %893 = vmatpush.msra.mxu0 0.0
    %894 = vmatpush.msra.mxu0 0.0
    %895 = vmatpush.msra.mxu0 0.0
    %896 = vmatpush.msra.mxu0 0.0
    %897 = vmatpush.msra.mxu0 0.0
    %898 = vmatpush.msra.mxu0 0.0
    %899 = vmatpush.msra.mxu0 %v850
    %900 = vmatpush.msra.mxu0 %v849
    %901 = vmatpush.msra.mxu0 %v848
    %902 = vmatpush.msra.mxu0 %v847
    %903 = vmatpush.msra.mxu0 %v846
    %904 = vmatpush.msra.mxu0 %v845
    %905 = vmatpush.msra.mxu0 %v844
    %906 = vmatpush.msra.mxu0 %v843
    %907 = vmatmul.f32.gmra.mxu0 %v880
    %v908 = vpop.f32.mrf.mxu0
    %v909 = vadd.f32 %v862, %v908
    %910 = vmatmul.f32.gmra.mxu0 %v883
    %v911 = vpop.f32.mrf.mxu0
    %v912 = vadd.f32 %v867, %v911
    %913 = vmatmul.f32.gmra.mxu0 %v886
    %v914 = vpop.f32.mrf.mxu0
    %v915 = vadd.f32 %v872, %v914
    %916 = vmatmul.f32.gmra.mxu0 %v889
    %v917 = vpop.f32.mrf.mxu0
    %v918 = vadd.f32 %v877, %v917
    %919 = vdwg.mxu0
    %v920 = vtanh.pop %v909
    %v921 = vtanh.pop %v912
    %v922 = vtanh.pop %v915
    %v923 = vtanh.pop %v918
    %v924 = vld [vmem:[%s15] sm:$0xff]
    %v925 = vld [vmem:[%s15 + $0x8] sm:$0xff]
    %v926 = vld [vmem:[%s15 + $0x10] sm:$0xff]
    %v927 = vld [vmem:[%s15 + $0x18] sm:$0xff]
    %v928 = vld [vmem:[%s16] sm:$0xff]
    %v929 = vld [vmem:[%s16 + $0x8] sm:$0xff]
    %v930 = vld [vmem:[%s16 + $0x10] sm:$0xff]
    %v931 = vld [vmem:[%s16 + $0x18] sm:$0xff]
    %933 = vset.pattern.permute.xlu0 0
    %934 = vperm.xlu0 %933, %v928
    %v935 = vpop.permute.xlu0 %934
    %938 = vset.pattern.permute.xlu0 0
    %939 = vperm.xlu0 %938, %v929
    %v940 = vpop.permute.xlu0 %939
    %943 = vset.pattern.permute.xlu0 0
    %944 = vperm.xlu0 %943, %v930
    %v945 = vpop.permute.xlu0 %944
    %948 = vset.pattern.permute.xlu0 0
    %949 = vperm.xlu0 %948, %v931
    %v950 = vpop.permute.xlu0 %949
    %vm952 = vcmask 261120
    %v954 = vsel %vm952, %v924, 0
    %v957 = vsel %vm952, %v925, 0
    %v960 = vsel %vm952, %v926, 0
    %v963 = vsel %vm952, %v927, 0
    %965 = vmatpush.msra.mxu0 0.0
    %966 = vmatpush.msra.mxu0 0.0
    %967 = vmatpush.msra.mxu0 0.0
    %968 = vmatpush.msra.mxu0 0.0
    %969 = vmatpush.msra.mxu0 0.0
    %970 = vmatpush.msra.mxu0 0.0
    %971 = vmatpush.msra.mxu0 0.0
    %972 = vmatpush.msra.mxu0 0.0
    %973 = vmatpush.msra.mxu0 0.0
    %974 = vmatpush.msra.mxu0 0.0
    %975 = vmatpush.msra.mxu0 0.0
    %976 = vmatpush.msra.mxu0 0.0
    %977 = vmatpush.msra.mxu0 %v923
    %978 = vmatpush.msra.mxu0 %v922
    %979 = vmatpush.msra.mxu0 %v921
    %980 = vmatpush.msra.mxu0 %v920
    %981 = vmatmul.f32.gmra.mxu0 %v954
    %v982 = vpop.f32.mrf.mxu0
    %v983 = vadd.f32 %v935, %v982
    %984 = vmatmul.f32.gmra.mxu0 %v957
    %v985 = vpop.f32.mrf.mxu0
    %v986 = vadd.f32 %v940, %v985
    %987 = vmatmul.f32.gmra.mxu0 %v960
    %v988 = vpop.f32.mrf.mxu0
    %v989 = vadd.f32 %v945, %v988
    %990 = vmatmul.f32.gmra.mxu0 %v963
    %v991 = vpop.f32.mrf.mxu0
    %v992 = vadd.f32 %v950, %v991
    %993 = vdwg.mxu0
    %v994 = vtanh.pop %v983
    %v995 = vtanh.pop %v986
    %v996 = vtanh.pop %v989
    %v997 = vtanh.pop %v992
    %v998 = vld [vmem:[%s17] sm:$0xff]
    %v999 = vld [vmem:[%s17 + $0x8] sm:$0xff]
    %v1000 = vld [vmem:[%s17 + $0x10] sm:$0xff]
    %v1001 = vld [vmem:[%s17 + $0x18] sm:$0xff]
    %v1002 = vld [vmem:[%s18] sm:$0xff]
    %v1003 = vld [vmem:[%s18 + $0x8] sm:$0xff]
    %v1004 = vld [vmem:[%s18 + $0x10] sm:$0xff]
    %v1005 = vld [vmem:[%s18 + $0x18] sm:$0xff]
    %1007 = vset.pattern.permute.xlu0 0
    %1008 = vperm.xlu0 %1007, %v1002
    %v1009 = vpop.permute.xlu0 %1008
    %1012 = vset.pattern.permute.xlu0 0
    %1013 = vperm.xlu0 %1012, %v1003
    %v1014 = vpop.permute.xlu0 %1013
    %1017 = vset.pattern.permute.xlu0 0
    %1018 = vperm.xlu0 %1017, %v1004
    %v1019 = vpop.permute.xlu0 %1018
    %1022 = vset.pattern.permute.xlu0 0
    %1023 = vperm.xlu0 %1022, %v1005
    %v1024 = vpop.permute.xlu0 %1023
    %v1027 = vsel %vm952, %v998, 0
    %v1030 = vsel %vm952, %v999, 0
    %v1033 = vsel %vm952, %v1000, 0
    %v1036 = vsel %vm952, %v1001, 0
    %1038 = vmatpush.msra.mxu0 0.0
    %1039 = vmatpush.msra.mxu0 0.0
    %1040 = vmatpush.msra.mxu0 0.0
    %1041 = vmatpush.msra.mxu0 0.0
    %1042 = vmatpush.msra.mxu0 0.0
    %1043 = vmatpush.msra.mxu0 0.0
    %1044 = vmatpush.msra.mxu0 0.0
    %1045 = vmatpush.msra.mxu0 0.0
    %1046 = vmatpush.msra.mxu0 0.0
    %1047 = vmatpush.msra.mxu0 0.0
    %1048 = vmatpush.msra.mxu0 0.0
    %1049 = vmatpush.msra.mxu0 0.0
    %1050 = vmatpush.msra.mxu0 %v997
    %1051 = vmatpush.msra.mxu0 %v996
    %1052 = vmatpush.msra.mxu0 %v995
    %1053 = vmatpush.msra.mxu0 %v994
    %1054 = vmatmul.f32.gmra.mxu0 %v1027
    %v1055 = vpop.f32.mrf.mxu0
    %v1056 = vadd.f32 %v1009, %v1055
    %1057 = vmatmul.f32.gmra.mxu0 %v1030
    %v1058 = vpop.f32.mrf.mxu0
    %v1059 = vadd.f32 %v1014, %v1058
    %1060 = vmatmul.f32.gmra.mxu0 %v1033
    %v1061 = vpop.f32.mrf.mxu0
    %v1062 = vadd.f32 %v1019, %v1061
    %1063 = vmatmul.f32.gmra.mxu0 %v1036
    %v1064 = vpop.f32.mrf.mxu0
    %v1065 = vadd.f32 %v1024, %v1064
    %1066 = vdwg.mxu0
    %v1067 = vtanh.pop %v1056
    %v1068 = vtanh.pop %v1059
    %v1069 = vtanh.pop %v1062
    %v1070 = vtanh.pop %v1065
    %v1071 = vld [vmem:[%s19] sm:$0x1]
    %v1072 = vld [vmem:[#allocation2] sm:$0x1]
    %1074 = vset.pattern.permute.xlu0 0
    %1075 = vperm.xlu0 %1074, %v1072
    %v1076 = vpop.permute.xlu0 %1075
    %v1078 = vperm.slane %v1076, 0
    %v1080 = vsel %vm952, %v1071, 0
    %1082 = vmatpush.msra.mxu0 0.0
    %1083 = vmatpush.msra.mxu0 0.0
    %1084 = vmatpush.msra.mxu0 0.0
    %1085 = vmatpush.msra.mxu0 0.0
    %1086 = vmatpush.msra.mxu0 0.0
    %1087 = vmatpush.msra.mxu0 0.0
    %1088 = vmatpush.msra.mxu0 0.0
    %1089 = vmatpush.msra.mxu0 0.0
    %1090 = vmatpush.msra.mxu0 0.0
    %1091 = vmatpush.msra.mxu0 0.0
    %1092 = vmatpush.msra.mxu0 0.0
    %1093 = vmatpush.msra.mxu0 0.0
    %1094 = vmatpush.msra.mxu0 %v1070
    %1095 = vmatpush.msra.mxu0 %v1069
    %1096 = vmatpush.msra.mxu0 %v1068
    %1097 = vmatpush.msra.mxu0 %v1067
    %1098 = vmatmul.f32.gmra.mxu0 %v1080
    %v1099 = vpop.f32.mrf.mxu0
    %v1100 = vadd.f32 %v1078, %v1099
    %1101 = vdwg.mxu0
    %vm1102 = vcmask 57344
    %1103 = vst.msk [vmem:[#allocation3] sm:$0x1] %vm1102, %v1100
    // Predicated region
    $region86: #{mlp_forward.1} parent=1 // pred_check
      _
    $region87: #{mlp_forward.1} parent=1 // pred_check_branch
      %1105 = sbr.rel (0) target = $region89
    $region88: #{mlp_forward.1} parent=1 // pred_region
      %1107 = vsyncadd [#allocation4], 0
      %s1109 = sshll.u32 [#allocation3], 4
      %s1110 = int_to_ptr.vmem [resolvable:$true] %s1109
      %s1111 = sshll.u32 %s21, 4
      %s1112 = int_to_ptr.hbm [resolvable:$true] %s1111
      %1114 = dma.vmem_to_hbm [thread:$0]  %s1110, 16, %s1112, [#allocation4]
    $region89: #{mlp_forward.1} parent=1 // pred_fallthru
      _
    // Predicated region
    $region90: #{mlp_forward.1} parent=1 // pred_check
      _
    $region91: #{mlp_forward.1} parent=1 // pred_check_branch
      %1116 = sbr.rel (0) target = $region93
    $region92: #{mlp_forward.1} parent=1 // pred_region
      %1118 = dma.done [#allocation4], 16
    $region93: #{mlp_forward.1} parent=1 // pred_fallthru
      _
    %1119 = vsyncpa [#allocation4], 1

</llo_original>
